<compile_context>
chip_gen: v5e
topology: v5e:2x2
jax: 0.10.0
libtpu: 0.0.40
codegen_flags: <defaults>
</compile_context>

<pallas_src>
import functools

import numpy as np
import jax
import jax.numpy as jnp
from jax import lax
from jax.experimental import pallas as pl
from jax.experimental.pallas import tpu as pltpu


# ---------------------------------------------------------------------------
# Kernel: one grid step == the full sequence for one batch tile (all layers),
# with the FC head fused at the end.
# ---------------------------------------------------------------------------
def _rnn_fc_kernel(x_ref, *refs, n_layers, seq_len, batch_tile):
    """refs = [w_ih_0, w_hh_0, b_0, ..., w_ih_{L-1}, w_hh_{L-1}, b_{L-1},
               fc_w, fc_b, out_ref, seq_ref].

    x_ref:   (T, bt, I)   time-major fp32 input slab for this batch tile.
    seq_ref: (T*bt, H)    fp32 VMEM scratch; row t*bt + b = time step t, batch b.
                          Fully overwritten every grid step (no cross-tile leakage).
    """
    n_w = 3 * n_layers + 2
    w_refs = refs[:n_w]
    out_ref = refs[n_w]
    seq_ref = refs[n_w + 1]

    T, bt = seq_len, batch_tile
    H = seq_ref.shape[-1]
    f32 = jnp.float32

    h_last = None
    for l in range(n_layers):                       # static unroll over layers
        w_ih = w_refs[3 * l][...]                   # (in_dim, H) compute dtype
        w_hh = w_refs[3 * l + 1][...]               # (H, H)      compute dtype (hoisted)
        b = w_refs[3 * l + 2][...]                  # (1, H)      fp32, b_ih + b_hh folded

        # ---- input projection for ALL time steps: one big MXU matmul ----
        if l == 0:
            x = x_ref[...]                                  # (T, bt, I) fp32
            inp2d = x.reshape(T * bt, x.shape[-1])          # layout no-op (bt % 8 == 0)
        else:
            inp2d = seq_ref[...]                            # (T*bt, H) fp32 prev-layer out
        seq_ref[...] = (
            jnp.dot(inp2d.astype(w_ih.dtype), w_ih, preferred_element_type=f32) + b)

        # ---- sequential recurrence: only (bt,H)@(H,H) per step stays serial ----
        def step(t, h_prev, w_hh=w_hh):
            row = pl.multiple_of(t * bt, bt)                # 8-aligned dynamic start
            pre = seq_ref[pl.ds(row, bt), :] + jnp.dot(
                h_prev.astype(w_hh.dtype), w_hh, preferred_element_type=f32)
            h_new = jnp.tanh(pre)                           # fp32 tanh (v5e-safe)
            seq_ref[pl.ds(row, bt), :] = h_new              # next layer's input sequence
            return h_new

        h_last = lax.fori_loop(0, T, step, jnp.zeros((bt, H), f32),
                               unroll=(T <= 16))

    # ---- fused FC head on the last time step of the last layer ----
    fc_w = w_refs[3 * n_layers][...]                # (H, O) compute dtype
    fc_b = w_refs[3 * n_layers + 1][...]            # (1, O) fp32
    out_ref[...] = (
        jnp.dot(h_last.astype(fc_w.dtype), fc_w, preferred_element_type=f32)
        + fc_b).astype(out_ref.dtype)


# ---------------------------------------------------------------------------
# Wrapper
# ---------------------------------------------------------------------------
def _default_vmem_limit():
    try:
        cap = int(pltpu.get_tpu_info().vmem_capacity_bytes)
    except Exception:
        cap = 64 * 1024 * 1024            # conservative fallback (v7x-sized)
    return int(min((cap * 3) // 4, 100 * 1024 * 1024))


def _pick_batch_tile(b_pad):
    """Largest multiple-of-8 divisor <= 256 that leaves >=2 tiles (megacore)."""
    if b_pad < 16:
        return b_pad
    cap = min(b_pad // 2, 256)
    best = 8
    for bt in range(8, cap + 1, 8):
        if b_pad % bt == 0:
            best = bt
    return best


def rnn_model_forward(x, params, *, batch_tile=None, compute_dtype=jnp.bfloat16,
                      vmem_limit_bytes=None, interpret=False):
    """x: [B, T, input_size] (batch_first).  Returns fc(rnn(x)[:, -1, :]).

    NOTE: unlike the literal PyTorch code (hidden sized B//2, which would error),
    this uses a zero initial hidden state for the full batch.
    """
    B, T, I = x.shape
    layers = params["layers"]
    n_layers = len(layers)
    assert n_layers >= 1
    H = layers[0]["w_hh"].shape[0]
    O = params["fc_w"].shape[0]

    # Pad batch to a multiple of 8 sublanes (hardware pads anyway); makes the
    # in-kernel (T, bt, I) -> (T*bt, I) reshape a layout no-op.
    B_pad = max(8, ((B + 7) // 8) * 8)
    x_tm = jnp.transpose(x.astype(jnp.float32), (1, 0, 2))          # (T, B, I)
    if B_pad != B:
        x_tm = jnp.pad(x_tm, ((0, 0), (0, B_pad - B), (0, 0)))

    if batch_tile is None:
        batch_tile = _pick_batch_tile(B_pad)
    assert B_pad % batch_tile == 0 and batch_tile % 8 == 0
    n_btiles = B_pad // batch_tile

    if vmem_limit_bytes is None:
        vmem_limit_bytes = _default_vmem_limit()

    # Pre-transposed weights (bf16 by default) + folded fp32 biases.
    w_args = []
    for lyr in layers:
        w_args += [
            jnp.transpose(lyr["w_ih"]).astype(compute_dtype),               # (in, H)
            jnp.transpose(lyr["w_hh"]).astype(compute_dtype),               # (H, H)
            (lyr["b_ih"] + lyr["b_hh"]).reshape(1, H).astype(jnp.float32),  # (1, H)
        ]
    w_args += [
        jnp.transpose(params["fc_w"]).astype(compute_dtype),                # (H, O)
        params["fc_b"].reshape(1, O).astype(jnp.float32),                   # (1, O)
    ]
    # Constant index maps -> weight blocks stay VMEM-resident across batch tiles.
    w_specs = [pl.BlockSpec(a.shape, lambda b: (0, 0)) for a in w_args]

    in_specs = [pl.BlockSpec((T, batch_tile, I), lambda b: (0, b, 0))] + w_specs
    out_spec = pl.BlockSpec((batch_tile, O), lambda b: (b, 0))

    flops, in_dim = 0, I
    for _ in range(n_layers):
        flops += 2 * B_pad * T * (in_dim * H + H * H)
        in_dim = H
    flops += 2 * B_pad * H * O
    transcendentals = B_pad * T * H * n_layers
    bytes_accessed = (int(x_tm.size) * 4
                      + sum(int(a.size) * a.dtype.itemsize for a in w_args)
                      + B_pad * O * 4)

    kern = functools.partial(_rnn_fc_kernel, n_layers=n_layers,
                             seq_len=T, batch_tile=batch_tile)
    out = pl.pallas_call(
        kern,
        out_shape=jax.ShapeDtypeStruct((B_pad, O), jnp.float32),
        grid_spec=pltpu.PrefetchScalarGridSpec(
            num_scalar_prefetch=0,
            grid=(n_btiles,),
            in_specs=in_specs,
            out_specs=out_spec,
            scratch_shapes=[pltpu.VMEM((T * batch_tile, H), jnp.float32)],
        ),
        compiler_params=pltpu.CompilerParams(
            dimension_semantics=("parallel",),
            vmem_limit_bytes=int(vmem_limit_bytes),
        ),
        cost_estimate=pl.CostEstimate(
            flops=int(flops),
            transcendentals=int(transcendentals),
            bytes_accessed=int(bytes_accessed),
        ),
        interpret=interpret,
    )(x_tm, *w_args)
    return out[:B]


# ---------------------------------------------------------------------------
# Parameters (PyTorch-style uniform(-1/sqrt(H), 1/sqrt(H)) init) and reference
# ---------------------------------------------------------------------------
def make_params(key, input_size, hidden_dim, output_size, n_layers):
    bound = 1.0 / np.sqrt(hidden_dim)
    keys = iter(jax.random.split(key, 4 * n_layers + 2))
    layers = []
    for l in range(n_layers):
        in_dim = input_size if l == 0 else hidden_dim
        layers.append({
            "w_ih": jax.random.uniform(next(keys), (hidden_dim, in_dim),
                                       jnp.float32, -bound, bound),
            "w_hh": jax.random.uniform(next(keys), (hidden_dim, hidden_dim),
                                       jnp.float32, -bound, bound),
            "b_ih": jax.random.uniform(next(keys), (hidden_dim,),
                                       jnp.float32, -bound, bound),
            "b_hh": jax.random.uniform(next(keys), (hidden_dim,),
                                       jnp.float32, -bound, bound),
        })
    fc_w = jax.random.uniform(next(keys), (output_size, hidden_dim),
                              jnp.float32, -bound, bound)
    fc_b = jax.random.uniform(next(keys), (output_size,),
                              jnp.float32, -bound, bound)
    return {"layers": layers, "fc_w": fc_w, "fc_b": fc_b}


def rnn_model_reference(x, params):
    """Pure-JAX reference for correctness checking."""
    B = x.shape[0]
    seq = x.astype(jnp.float32)
    for lyr in params["layers"]:
        w_ih, w_hh = lyr["w_ih"], lyr["w_hh"]
        b = lyr["b_ih"] + lyr["b_hh"]
        h0 = jnp.zeros((B, w_hh.shape[0]), jnp.float32)

        def step(h_prev, x_t, w_ih=w_ih, w_hh=w_hh, b=b):
            h_new = jnp.tanh(x_t @ w_ih.T + h_prev @ w_hh.T + b)
            return h_new, h_new

        _, outs = jax.lax.scan(step, h0, jnp.transpose(seq, (1, 0, 2)))
        seq = jnp.transpose(outs, (1, 0, 2))
    last = seq[:, -1, :]
    return last @ params["fc_w"].T + params["fc_b"]


# ---------------------------------------------------------------------------
if __name__ == "__main__":
    B, T, INPUT, HIDDEN, OUTPUT, NLAYERS = 2, 8, 4, 32, 8, 2

    key = jax.random.PRNGKey(0)
    kp, kx = jax.random.split(key)
    params = make_params(kp, INPUT, HIDDEN, OUTPUT, NLAYERS)
    x = jax.random.normal(kx, (B, T, INPUT), jnp.float32)   # batch_first like torch

    ref = jax.block_until_ready(rnn_model_reference(x, params))

    # fp32 matmul path: tighter check of the kernel math.
    out_f32 = jax.block_until_ready(
        rnn_model_forward(x, params, compute_dtype=jnp.float32))
    assert out_f32.shape == (B, OUTPUT), out_f32.shape
    assert out_f32.dtype == jnp.float32
    np.testing.assert_allclose(np.asarray(out_f32), np.asarray(ref),
                               rtol=2e-2, atol=2e-2)

    # Default bf16-matmul / fp32-accumulate path (the performance configuration).
    out_bf16 = jax.block_until_ready(rnn_model_forward(x, params))
    assert out_bf16.shape == (B, OUTPUT), out_bf16.shape
    np.testing.assert_allclose(np.asarray(out_bf16), np.asarray(ref),
                               rtol=6e-2, atol=6e-2)

    print("KERNEL_OK")
</pallas_src>

<mosaic_0001>
module attributes {stable_mosaic.version = 11 : i64} {
  func.func @_rnn_fc_kernel(%arg0: i32, %arg1: memref<8x8x4xf32, #tpu.memory_space<vmem>>, %arg2: memref<4x32xf32, #tpu.memory_space<vmem>>, %arg3: memref<32x32xf32, #tpu.memory_space<vmem>>, %arg4: memref<1x32xf32, #tpu.memory_space<vmem>>, %arg5: memref<32x32xf32, #tpu.memory_space<vmem>>, %arg6: memref<32x32xf32, #tpu.memory_space<vmem>>, %arg7: memref<1x32xf32, #tpu.memory_space<vmem>>, %arg8: memref<32x8xf32, #tpu.memory_space<vmem>>, %arg9: memref<1x8xf32, #tpu.memory_space<vmem>>, %arg10: memref<8x8xf32, #tpu.memory_space<vmem>>, %arg11: memref<64x32xf32, #tpu.memory_space<vmem>>) attributes {dimension_semantics = [#tpu.dimension_semantics<parallel>], iteration_bounds = array<i64: 1>, scalar_prefetch = 0 : i64, scratch_operands = 1 : i64, tpu.core_type = #tpu.core_type<tc>, window_params = [{transform_indices = @transform_0, window_bounds = array<i64: 8, 8, 4>}, {pipeline_mode = #tpu.pipeline_mode<synchronous>, transform_indices = @transform_1, window_bounds = array<i64: 4, 32>}, {pipeline_mode = #tpu.pipeline_mode<synchronous>, transform_indices = @transform_2, window_bounds = array<i64: 32, 32>}, {pipeline_mode = #tpu.pipeline_mode<synchronous>, transform_indices = @transform_3, window_bounds = array<i64: 1, 32>}, {pipeline_mode = #tpu.pipeline_mode<synchronous>, transform_indices = @transform_4, window_bounds = array<i64: 32, 32>}, {pipeline_mode = #tpu.pipeline_mode<synchronous>, transform_indices = @transform_5, window_bounds = array<i64: 32, 32>}, {pipeline_mode = #tpu.pipeline_mode<synchronous>, transform_indices = @transform_6, window_bounds = array<i64: 1, 32>}, {pipeline_mode = #tpu.pipeline_mode<synchronous>, transform_indices = @transform_7, window_bounds = array<i64: 32, 8>}, {pipeline_mode = #tpu.pipeline_mode<synchronous>, transform_indices = @transform_8, window_bounds = array<i64: 1, 8>}, {transform_indices = @transform_9, window_bounds = array<i64: 8, 8>}]} {
    %c0 = arith.constant 0 : index
    %c0_0 = arith.constant 0 : index
    %0 = vector.load %arg2[%c0, %c0_0] : memref<4x32xf32, #tpu.memory_space<vmem>>, vector<4x32xf32>
    %c0_1 = arith.constant 0 : index
    %c0_2 = arith.constant 0 : index
    %1 = vector.load %arg3[%c0_1, %c0_2] : memref<32x32xf32, #tpu.memory_space<vmem>>, vector<32x32xf32>
    %c0_3 = arith.constant 0 : index
    %c0_4 = arith.constant 0 : index
    %2 = vector.load %arg4[%c0_3, %c0_4] : memref<1x32xf32, #tpu.memory_space<vmem>>, vector<1x32xf32>
    %c0_5 = arith.constant 0 : index
    %c0_6 = arith.constant 0 : index
    %c0_7 = arith.constant 0 : index
    %3 = vector.load %arg1[%c0_5, %c0_6, %c0_7] : memref<8x8x4xf32, #tpu.memory_space<vmem>>, vector<8x8x4xf32>
    %4 = vector.shape_cast %3 : vector<8x8x4xf32> to vector<64x4xf32>
    %cst = arith.constant dense<0.000000e+00> : vector<64x32xf32>
    %5 = tpu.matmul %4, %0, %cst {dimension_numbers = #tpu.dot_dimension_numbers<[1], [0], [0], [1], [0, 0, 1, 1], [], []>} : vector<64x4xf32>, vector<4x32xf32>, vector<64x32xf32> -> vector<64x32xf32>
    %6 = vector.broadcast %2 : vector<1x32xf32> to vector<64x32xf32>
    %7 = arith.addf %5, %6 : vector<64x32xf32>
    %c0_8 = arith.constant 0 : index
    %c0_9 = arith.constant 0 : index
    %8 = vector.load %arg11[%c0_8, %c0_9] : memref<64x32xf32, #tpu.memory_space<vmem>>, vector<64x32xf32>
    tpu.vector_store %arg11[%c0_8, %c0_9], %7 {strides = array<i32>} : memref<64x32xf32, #tpu.memory_space<vmem>>, vector<64x32xf32>,
    %cst_10 = arith.constant 0.000000e+00 : f32
    %9 = vector.broadcast %cst_10 : f32 to vector<8x32xf32>
    %c0_i32 = arith.constant 0 : i32
    %c8_i32 = arith.constant 8 : i32
    %10 = arith.muli %c0_i32, %c8_i32 : i32
    %11 = tpu.assume_multiple %10, 8 : i32
    %12 = arith.index_cast %11 : i32 to index
    %c0_11 = arith.constant 0 : index
    %13 = vector.load %arg11[%12, %c0_11] : memref<64x32xf32, #tpu.memory_space<vmem>>, vector<8x32xf32>
    %cst_12 = arith.constant dense<0.000000e+00> : vector<8x32xf32>
    %14 = tpu.matmul %9, %1, %cst_12 {dimension_numbers = #tpu.dot_dimension_numbers<[1], [0], [0], [1], [0, 0, 1, 1], [], []>} : vector<8x32xf32>, vector<32x32xf32>, vector<8x32xf32> -> vector<8x32xf32>
    %15 = arith.addf %13, %14 : vector<8x32xf32>
    %16 = math.tanh %15 : vector<8x32xf32>
    %17 = arith.index_cast %11 : i32 to index
    %c0_13 = arith.constant 0 : index
    %18 = vector.load %arg11[%17, %c0_13] : memref<64x32xf32, #tpu.memory_space<vmem>>, vector<8x32xf32>
    tpu.vector_store %arg11[%17, %c0_13], %16 {strides = array<i32>} : memref<64x32xf32, #tpu.memory_space<vmem>>, vector<8x32xf32>,
    %c1_i32 = arith.constant 1 : i32
    %c8_i32_14 = arith.constant 8 : i32
    %19 = arith.muli %c1_i32, %c8_i32_14 : i32
    %20 = tpu.assume_multiple %19, 8 : i32
    %21 = arith.index_cast %20 : i32 to index
    %c0_15 = arith.constant 0 : index
    %22 = vector.load %arg11[%21, %c0_15] : memref<64x32xf32, #tpu.memory_space<vmem>>, vector<8x32xf32>
    %cst_16 = arith.constant dense<0.000000e+00> : vector<8x32xf32>
    %23 = tpu.matmul %16, %1, %cst_16 {dimension_numbers = #tpu.dot_dimension_numbers<[1], [0], [0], [1], [0, 0, 1, 1], [], []>} : vector<8x32xf32>, vector<32x32xf32>, vector<8x32xf32> -> vector<8x32xf32>
    %24 = arith.addf %22, %23 : vector<8x32xf32>
    %25 = math.tanh %24 : vector<8x32xf32>
    %26 = arith.index_cast %20 : i32 to index
    %c0_17 = arith.constant 0 : index
    %27 = vector.load %arg11[%26, %c0_17] : memref<64x32xf32, #tpu.memory_space<vmem>>, vector<8x32xf32>
    tpu.vector_store %arg11[%26, %c0_17], %25 {strides = array<i32>} : memref<64x32xf32, #tpu.memory_space<vmem>>, vector<8x32xf32>,
    %c2_i32 = arith.constant 2 : i32
    %c8_i32_18 = arith.constant 8 : i32
    %28 = arith.muli %c2_i32, %c8_i32_18 : i32
    %29 = tpu.assume_multiple %28, 8 : i32
    %30 = arith.index_cast %29 : i32 to index
    %c0_19 = arith.constant 0 : index
    %31 = vector.load %arg11[%30, %c0_19] : memref<64x32xf32, #tpu.memory_space<vmem>>, vector<8x32xf32>
    %cst_20 = arith.constant dense<0.000000e+00> : vector<8x32xf32>
    %32 = tpu.matmul %25, %1, %cst_20 {dimension_numbers = #tpu.dot_dimension_numbers<[1], [0], [0], [1], [0, 0, 1, 1], [], []>} : vector<8x32xf32>, vector<32x32xf32>, vector<8x32xf32> -> vector<8x32xf32>
    %33 = arith.addf %31, %32 : vector<8x32xf32>
    %34 = math.tanh %33 : vector<8x32xf32>
    %35 = arith.index_cast %29 : i32 to index
    %c0_21 = arith.constant 0 : index
    %36 = vector.load %arg11[%35, %c0_21] : memref<64x32xf32, #tpu.memory_space<vmem>>, vector<8x32xf32>
    tpu.vector_store %arg11[%35, %c0_21], %34 {strides = array<i32>} : memref<64x32xf32, #tpu.memory_space<vmem>>, vector<8x32xf32>,
    %c3_i32 = arith.constant 3 : i32
    %c8_i32_22 = arith.constant 8 : i32
    %37 = arith.muli %c3_i32, %c8_i32_22 : i32
    %38 = tpu.assume_multiple %37, 8 : i32
    %39 = arith.index_cast %38 : i32 to index
    %c0_23 = arith.constant 0 : index
    %40 = vector.load %arg11[%39, %c0_23] : memref<64x32xf32, #tpu.memory_space<vmem>>, vector<8x32xf32>
    %cst_24 = arith.constant dense<0.000000e+00> : vector<8x32xf32>
    %41 = tpu.matmul %34, %1, %cst_24 {dimension_numbers = #tpu.dot_dimension_numbers<[1], [0], [0], [1], [0, 0, 1, 1], [], []>} : vector<8x32xf32>, vector<32x32xf32>, vector<8x32xf32> -> vector<8x32xf32>
    %42 = arith.addf %40, %41 : vector<8x32xf32>
    %43 = math.tanh %42 : vector<8x32xf32>
    %44 = arith.index_cast %38 : i32 to index
    %c0_25 = arith.constant 0 : index
    %45 = vector.load %arg11[%44, %c0_25] : memref<64x32xf32, #tpu.memory_space<vmem>>, vector<8x32xf32>
    tpu.vector_store %arg11[%44, %c0_25], %43 {strides = array<i32>} : memref<64x32xf32, #tpu.memory_space<vmem>>, vector<8x32xf32>,
    %c4_i32 = arith.constant 4 : i32
    %c8_i32_26 = arith.constant 8 : i32
    %46 = arith.muli %c4_i32, %c8_i32_26 : i32
    %47 = tpu.assume_multiple %46, 8 : i32
    %48 = arith.index_cast %47 : i32 to index
    %c0_27 = arith.constant 0 : index
    %49 = vector.load %arg11[%48, %c0_27] : memref<64x32xf32, #tpu.memory_space<vmem>>, vector<8x32xf32>
    %cst_28 = arith.constant dense<0.000000e+00> : vector<8x32xf32>
    %50 = tpu.matmul %43, %1, %cst_28 {dimension_numbers = #tpu.dot_dimension_numbers<[1], [0], [0], [1], [0, 0, 1, 1], [], []>} : vector<8x32xf32>, vector<32x32xf32>, vector<8x32xf32> -> vector<8x32xf32>
    %51 = arith.addf %49, %50 : vector<8x32xf32>
    %52 = math.tanh %51 : vector<8x32xf32>
    %53 = arith.index_cast %47 : i32 to index
    %c0_29 = arith.constant 0 : index
    %54 = vector.load %arg11[%53, %c0_29] : memref<64x32xf32, #tpu.memory_space<vmem>>, vector<8x32xf32>
    tpu.vector_store %arg11[%53, %c0_29], %52 {strides = array<i32>} : memref<64x32xf32, #tpu.memory_space<vmem>>, vector<8x32xf32>,
    %c5_i32 = arith.constant 5 : i32
    %c8_i32_30 = arith.constant 8 : i32
    %55 = arith.muli %c5_i32, %c8_i32_30 : i32
    %56 = tpu.assume_multiple %55, 8 : i32
    %57 = arith.index_cast %56 : i32 to index
    %c0_31 = arith.constant 0 : index
    %58 = vector.load %arg11[%57, %c0_31] : memref<64x32xf32, #tpu.memory_space<vmem>>, vector<8x32xf32>
    %cst_32 = arith.constant dense<0.000000e+00> : vector<8x32xf32>
    %59 = tpu.matmul %52, %1, %cst_32 {dimension_numbers = #tpu.dot_dimension_numbers<[1], [0], [0], [1], [0, 0, 1, 1], [], []>} : vector<8x32xf32>, vector<32x32xf32>, vector<8x32xf32> -> vector<8x32xf32>
    %60 = arith.addf %58, %59 : vector<8x32xf32>
    %61 = math.tanh %60 : vector<8x32xf32>
    %62 = arith.index_cast %56 : i32 to index
    %c0_33 = arith.constant 0 : index
    %63 = vector.load %arg11[%62, %c0_33] : memref<64x32xf32, #tpu.memory_space<vmem>>, vector<8x32xf32>
    tpu.vector_store %arg11[%62, %c0_33], %61 {strides = array<i32>} : memref<64x32xf32, #tpu.memory_space<vmem>>, vector<8x32xf32>,
    %c6_i32 = arith.constant 6 : i32
    %c8_i32_34 = arith.constant 8 : i32
    %64 = arith.muli %c6_i32, %c8_i32_34 : i32
    %65 = tpu.assume_multiple %64, 8 : i32
    %66 = arith.index_cast %65 : i32 to index
    %c0_35 = arith.constant 0 : index
    %67 = vector.load %arg11[%66, %c0_35] : memref<64x32xf32, #tpu.memory_space<vmem>>, vector<8x32xf32>
    %cst_36 = arith.constant dense<0.000000e+00> : vector<8x32xf32>
    %68 = tpu.matmul %61, %1, %cst_36 {dimension_numbers = #tpu.dot_dimension_numbers<[1], [0], [0], [1], [0, 0, 1, 1], [], []>} : vector<8x32xf32>, vector<32x32xf32>, vector<8x32xf32> -> vector<8x32xf32>
    %69 = arith.addf %67, %68 : vector<8x32xf32>
    %70 = math.tanh %69 : vector<8x32xf32>
    %71 = arith.index_cast %65 : i32 to index
    %c0_37 = arith.constant 0 : index
    %72 = vector.load %arg11[%71, %c0_37] : memref<64x32xf32, #tpu.memory_space<vmem>>, vector<8x32xf32>
    tpu.vector_store %arg11[%71, %c0_37], %70 {strides = array<i32>} : memref<64x32xf32, #tpu.memory_space<vmem>>, vector<8x32xf32>,
    %c7_i32 = arith.constant 7 : i32
    %c8_i32_38 = arith.constant 8 : i32
    %73 = arith.muli %c7_i32, %c8_i32_38 : i32
    %74 = tpu.assume_multiple %73, 8 : i32
    %75 = arith.index_cast %74 : i32 to index
    %c0_39 = arith.constant 0 : index
    %76 = vector.load %arg11[%75, %c0_39] : memref<64x32xf32, #tpu.memory_space<vmem>>, vector<8x32xf32>
    %cst_40 = arith.constant dense<0.000000e+00> : vector<8x32xf32>
    %77 = tpu.matmul %70, %1, %cst_40 {dimension_numbers = #tpu.dot_dimension_numbers<[1], [0], [0], [1], [0, 0, 1, 1], [], []>} : vector<8x32xf32>, vector<32x32xf32>, vector<8x32xf32> -> vector<8x32xf32>
    %78 = arith.addf %76, %77 : vector<8x32xf32>
    %79 = math.tanh %78 : vector<8x32xf32>
    %80 = arith.index_cast %74 : i32 to index
    %c0_41 = arith.constant 0 : index
    %81 = vector.load %arg11[%80, %c0_41] : memref<64x32xf32, #tpu.memory_space<vmem>>, vector<8x32xf32>
    tpu.vector_store %arg11[%80, %c0_41], %79 {strides = array<i32>} : memref<64x32xf32, #tpu.memory_space<vmem>>, vector<8x32xf32>,
    %c8_i32_42 = arith.constant 8 : i32
    %c0_43 = arith.constant 0 : index
    %c0_44 = arith.constant 0 : index
    %82 = vector.load %arg5[%c0_43, %c0_44] : memref<32x32xf32, #tpu.memory_space<vmem>>, vector<32x32xf32>
    %c0_45 = arith.constant 0 : index
    %c0_46 = arith.constant 0 : index
    %83 = vector.load %arg6[%c0_45, %c0_46] : memref<32x32xf32, #tpu.memory_space<vmem>>, vector<32x32xf32>
    %c0_47 = arith.constant 0 : index
    %c0_48 = arith.constant 0 : index
    %84 = vector.load %arg7[%c0_47, %c0_48] : memref<1x32xf32, #tpu.memory_space<vmem>>, vector<1x32xf32>
    %c0_49 = arith.constant 0 : index
    %c0_50 = arith.constant 0 : index
    %85 = vector.load %arg11[%c0_49, %c0_50] : memref<64x32xf32, #tpu.memory_space<vmem>>, vector<64x32xf32>
    %cst_51 = arith.constant dense<0.000000e+00> : vector<64x32xf32>
    %86 = tpu.matmul %85, %82, %cst_51 {dimension_numbers = #tpu.dot_dimension_numbers<[1], [0], [0], [1], [0, 0, 1, 1], [], []>} : vector<64x32xf32>, vector<32x32xf32>, vector<64x32xf32> -> vector<64x32xf32>
    %87 = vector.broadcast %84 : vector<1x32xf32> to vector<64x32xf32>
    %88 = arith.addf %86, %87 : vector<64x32xf32>
    %c0_52 = arith.constant 0 : index
    %c0_53 = arith.constant 0 : index
    %89 = vector.load %arg11[%c0_52, %c0_53] : memref<64x32xf32, #tpu.memory_space<vmem>>, vector<64x32xf32>
    tpu.vector_store %arg11[%c0_52, %c0_53], %88 {strides = array<i32>} : memref<64x32xf32, #tpu.memory_space<vmem>>, vector<64x32xf32>,
    %cst_54 = arith.constant 0.000000e+00 : f32
    %90 = vector.broadcast %cst_54 : f32 to vector<8x32xf32>
    %c0_i32_55 = arith.constant 0 : i32
    %c8_i32_56 = arith.constant 8 : i32
    %91 = arith.muli %c0_i32_55, %c8_i32_56 : i32
    %92 = tpu.assume_multiple %91, 8 : i32
    %93 = arith.index_cast %92 : i32 to index
    %c0_57 = arith.constant 0 : index
    %94 = vector.load %arg11[%93, %c0_57] : memref<64x32xf32, #tpu.memory_space<vmem>>, vector<8x32xf32>
    %cst_58 = arith.constant dense<0.000000e+00> : vector<8x32xf32>
    %95 = tpu.matmul %90, %83, %cst_58 {dimension_numbers = #tpu.dot_dimension_numbers<[1], [0], [0], [1], [0, 0, 1, 1], [], []>} : vector<8x32xf32>, vector<32x32xf32>, vector<8x32xf32> -> vector<8x32xf32>
    %96 = arith.addf %94, %95 : vector<8x32xf32>
    %97 = math.tanh %96 : vector<8x32xf32>
    %98 = arith.index_cast %92 : i32 to index
    %c0_59 = arith.constant 0 : index
    %99 = vector.load %arg11[%98, %c0_59] : memref<64x32xf32, #tpu.memory_space<vmem>>, vector<8x32xf32>
    tpu.vector_store %arg11[%98, %c0_59], %97 {strides = array<i32>} : memref<64x32xf32, #tpu.memory_space<vmem>>, vector<8x32xf32>,
    %c1_i32_60 = arith.constant 1 : i32
    %c8_i32_61 = arith.constant 8 : i32
    %100 = arith.muli %c1_i32_60, %c8_i32_61 : i32
    %101 = tpu.assume_multiple %100, 8 : i32
    %102 = arith.index_cast %101 : i32 to index
    %c0_62 = arith.constant 0 : index
    %103 = vector.load %arg11[%102, %c0_62] : memref<64x32xf32, #tpu.memory_space<vmem>>, vector<8x32xf32>
    %cst_63 = arith.constant dense<0.000000e+00> : vector<8x32xf32>
    %104 = tpu.matmul %97, %83, %cst_63 {dimension_numbers = #tpu.dot_dimension_numbers<[1], [0], [0], [1], [0, 0, 1, 1], [], []>} : vector<8x32xf32>, vector<32x32xf32>, vector<8x32xf32> -> vector<8x32xf32>
    %105 = arith.addf %103, %104 : vector<8x32xf32>
    %106 = math.tanh %105 : vector<8x32xf32>
    %107 = arith.index_cast %101 : i32 to index
    %c0_64 = arith.constant 0 : index
    %108 = vector.load %arg11[%107, %c0_64] : memref<64x32xf32, #tpu.memory_space<vmem>>, vector<8x32xf32>
    tpu.vector_store %arg11[%107, %c0_64], %106 {strides = array<i32>} : memref<64x32xf32, #tpu.memory_space<vmem>>, vector<8x32xf32>,
    %c2_i32_65 = arith.constant 2 : i32
    %c8_i32_66 = arith.constant 8 : i32
    %109 = arith.muli %c2_i32_65, %c8_i32_66 : i32
    %110 = tpu.assume_multiple %109, 8 : i32
    %111 = arith.index_cast %110 : i32 to index
    %c0_67 = arith.constant 0 : index
    %112 = vector.load %arg11[%111, %c0_67] : memref<64x32xf32, #tpu.memory_space<vmem>>, vector<8x32xf32>
    %cst_68 = arith.constant dense<0.000000e+00> : vector<8x32xf32>
    %113 = tpu.matmul %106, %83, %cst_68 {dimension_numbers = #tpu.dot_dimension_numbers<[1], [0], [0], [1], [0, 0, 1, 1], [], []>} : vector<8x32xf32>, vector<32x32xf32>, vector<8x32xf32> -> vector<8x32xf32>
    %114 = arith.addf %112, %113 : vector<8x32xf32>
    %115 = math.tanh %114 : vector<8x32xf32>
    %116 = arith.index_cast %110 : i32 to index
    %c0_69 = arith.constant 0 : index
    %117 = vector.load %arg11[%116, %c0_69] : memref<64x32xf32, #tpu.memory_space<vmem>>, vector<8x32xf32>
    tpu.vector_store %arg11[%116, %c0_69], %115 {strides = array<i32>} : memref<64x32xf32, #tpu.memory_space<vmem>>, vector<8x32xf32>,
    %c3_i32_70 = arith.constant 3 : i32
    %c8_i32_71 = arith.constant 8 : i32
    %118 = arith.muli %c3_i32_70, %c8_i32_71 : i32
    %119 = tpu.assume_multiple %118, 8 : i32
    %120 = arith.index_cast %119 : i32 to index
    %c0_72 = arith.constant 0 : index
    %121 = vector.load %arg11[%120, %c0_72] : memref<64x32xf32, #tpu.memory_space<vmem>>, vector<8x32xf32>
    %cst_73 = arith.constant dense<0.000000e+00> : vector<8x32xf32>
    %122 = tpu.matmul %115, %83, %cst_73 {dimension_numbers = #tpu.dot_dimension_numbers<[1], [0], [0], [1], [0, 0, 1, 1], [], []>} : vector<8x32xf32>, vector<32x32xf32>, vector<8x32xf32> -> vector<8x32xf32>
    %123 = arith.addf %121, %122 : vector<8x32xf32>
    %124 = math.tanh %123 : vector<8x32xf32>
    %125 = arith.index_cast %119 : i32 to index
    %c0_74 = arith.constant 0 : index
    %126 = vector.load %arg11[%125, %c0_74] : memref<64x32xf32, #tpu.memory_space<vmem>>, vector<8x32xf32>
    tpu.vector_store %arg11[%125, %c0_74], %124 {strides = array<i32>} : memref<64x32xf32, #tpu.memory_space<vmem>>, vector<8x32xf32>,
    %c4_i32_75 = arith.constant 4 : i32
    %c8_i32_76 = arith.constant 8 : i32
    %127 = arith.muli %c4_i32_75, %c8_i32_76 : i32
    %128 = tpu.assume_multiple %127, 8 : i32
    %129 = arith.index_cast %128 : i32 to index
    %c0_77 = arith.constant 0 : index
    %130 = vector.load %arg11[%129, %c0_77] : memref<64x32xf32, #tpu.memory_space<vmem>>, vector<8x32xf32>
    %cst_78 = arith.constant dense<0.000000e+00> : vector<8x32xf32>
    %131 = tpu.matmul %124, %83, %cst_78 {dimension_numbers = #tpu.dot_dimension_numbers<[1], [0], [0], [1], [0, 0, 1, 1], [], []>} : vector<8x32xf32>, vector<32x32xf32>, vector<8x32xf32> -> vector<8x32xf32>
    %132 = arith.addf %130, %131 : vector<8x32xf32>
    %133 = math.tanh %132 : vector<8x32xf32>
    %134 = arith.index_cast %128 : i32 to index
    %c0_79 = arith.constant 0 : index
    %135 = vector.load %arg11[%134, %c0_79] : memref<64x32xf32, #tpu.memory_space<vmem>>, vector<8x32xf32>
    tpu.vector_store %arg11[%134, %c0_79], %133 {strides = array<i32>} : memref<64x32xf32, #tpu.memory_space<vmem>>, vector<8x32xf32>,
    %c5_i32_80 = arith.constant 5 : i32
    %c8_i32_81 = arith.constant 8 : i32
    %136 = arith.muli %c5_i32_80, %c8_i32_81 : i32
    %137 = tpu.assume_multiple %136, 8 : i32
    %138 = arith.index_cast %137 : i32 to index
    %c0_82 = arith.constant 0 : index
    %139 = vector.load %arg11[%138, %c0_82] : memref<64x32xf32, #tpu.memory_space<vmem>>, vector<8x32xf32>
    %cst_83 = arith.constant dense<0.000000e+00> : vector<8x32xf32>
    %140 = tpu.matmul %133, %83, %cst_83 {dimension_numbers = #tpu.dot_dimension_numbers<[1], [0], [0], [1], [0, 0, 1, 1], [], []>} : vector<8x32xf32>, vector<32x32xf32>, vector<8x32xf32> -> vector<8x32xf32>
    %141 = arith.addf %139, %140 : vector<8x32xf32>
    %142 = math.tanh %141 : vector<8x32xf32>
    %143 = arith.index_cast %137 : i32 to index
    %c0_84 = arith.constant 0 : index
    %144 = vector.load %arg11[%143, %c0_84] : memref<64x32xf32, #tpu.memory_space<vmem>>, vector<8x32xf32>
    tpu.vector_store %arg11[%143, %c0_84], %142 {strides = array<i32>} : memref<64x32xf32, #tpu.memory_space<vmem>>, vector<8x32xf32>,
    %c6_i32_85 = arith.constant 6 : i32
    %c8_i32_86 = arith.constant 8 : i32
    %145 = arith.muli %c6_i32_85, %c8_i32_86 : i32
    %146 = tpu.assume_multiple %145, 8 : i32
    %147 = arith.index_cast %146 : i32 to index
    %c0_87 = arith.constant 0 : index
    %148 = vector.load %arg11[%147, %c0_87] : memref<64x32xf32, #tpu.memory_space<vmem>>, vector<8x32xf32>
    %cst_88 = arith.constant dense<0.000000e+00> : vector<8x32xf32>
    %149 = tpu.matmul %142, %83, %cst_88 {dimension_numbers = #tpu.dot_dimension_numbers<[1], [0], [0], [1], [0, 0, 1, 1], [], []>} : vector<8x32xf32>, vector<32x32xf32>, vector<8x32xf32> -> vector<8x32xf32>
    %150 = arith.addf %148, %149 : vector<8x32xf32>
    %151 = math.tanh %150 : vector<8x32xf32>
    %152 = arith.index_cast %146 : i32 to index
    %c0_89 = arith.constant 0 : index
    %153 = vector.load %arg11[%152, %c0_89] : memref<64x32xf32, #tpu.memory_space<vmem>>, vector<8x32xf32>
    tpu.vector_store %arg11[%152, %c0_89], %151 {strides = array<i32>} : memref<64x32xf32, #tpu.memory_space<vmem>>, vector<8x32xf32>,
    %c7_i32_90 = arith.constant 7 : i32
    %c8_i32_91 = arith.constant 8 : i32
    %154 = arith.muli %c7_i32_90, %c8_i32_91 : i32
    %155 = tpu.assume_multiple %154, 8 : i32
    %156 = arith.index_cast %155 : i32 to index
    %c0_92 = arith.constant 0 : index
    %157 = vector.load %arg11[%156, %c0_92] : memref<64x32xf32, #tpu.memory_space<vmem>>, vector<8x32xf32>
    %cst_93 = arith.constant dense<0.000000e+00> : vector<8x32xf32>
    %158 = tpu.matmul %151, %83, %cst_93 {dimension_numbers = #tpu.dot_dimension_numbers<[1], [0], [0], [1], [0, 0, 1, 1], [], []>} : vector<8x32xf32>, vector<32x32xf32>, vector<8x32xf32> -> vector<8x32xf32>
    %159 = arith.addf %157, %158 : vector<8x32xf32>
    %160 = math.tanh %159 : vector<8x32xf32>
    %161 = arith.index_cast %155 : i32 to index
    %c0_94 = arith.constant 0 : index
    %162 = vector.load %arg11[%161, %c0_94] : memref<64x32xf32, #tpu.memory_space<vmem>>, vector<8x32xf32>
    tpu.vector_store %arg11[%161, %c0_94], %160 {strides = array<i32>} : memref<64x32xf32, #tpu.memory_space<vmem>>, vector<8x32xf32>,
    %c8_i32_95 = arith.constant 8 : i32
    %c0_96 = arith.constant 0 : index
    %c0_97 = arith.constant 0 : index
    %163 = vector.load %arg8[%c0_96, %c0_97] : memref<32x8xf32, #tpu.memory_space<vmem>>, vector<32x8xf32>
    %c0_98 = arith.constant 0 : index
    %c0_99 = arith.constant 0 : index
    %164 = vector.load %arg9[%c0_98, %c0_99] : memref<1x8xf32, #tpu.memory_space<vmem>>, vector<1x8xf32>
    %cst_100 = arith.constant dense<0.000000e+00> : vector<8x8xf32>
    %165 = tpu.matmul %160, %163, %cst_100 {dimension_numbers = #tpu.dot_dimension_numbers<[1], [0], [0], [1], [0, 0, 1, 1], [], []>} : vector<8x32xf32>, vector<32x8xf32>, vector<8x8xf32> -> vector<8x8xf32>
    %166 = vector.broadcast %164 : vector<1x8xf32> to vector<8x8xf32>
    %167 = arith.addf %165, %166 : vector<8x8xf32>
    %c0_101 = arith.constant 0 : index
    %c0_102 = arith.constant 0 : index
    %168 = vector.load %arg10[%c0_101, %c0_102] : memref<8x8xf32, #tpu.memory_space<vmem>>, vector<8x8xf32>
    tpu.vector_store %arg10[%c0_101, %c0_102], %167 {strides = array<i32>} : memref<8x8xf32, #tpu.memory_space<vmem>>, vector<8x8xf32>,
    return
  }
  func.func @transform_0(%arg0: i32) -> (i32, i32, i32) {
    %c0_i32 = arith.constant 0 : i32
    %c0_i32_0 = arith.constant 0 : i32
    %c0_i32_1 = arith.constant 0 : i32
    return %c0_i32, %arg0, %c0_i32_0 : i32, i32, i32
  }
  func.func @transform_1(%arg0: i32) -> (i32, i32) {
    %c0_i32 = arith.constant 0 : i32
    %c0_i32_0 = arith.constant 0 : i32
    %c0_i32_1 = arith.constant 0 : i32
    return %c0_i32, %c0_i32_0 : i32, i32
  }
  func.func @transform_2(%arg0: i32) -> (i32, i32) {
    %c0_i32 = arith.constant 0 : i32
    %c0_i32_0 = arith.constant 0 : i32
    %c0_i32_1 = arith.constant 0 : i32
    return %c0_i32, %c0_i32_0 : i32, i32
  }
  func.func @transform_3(%arg0: i32) -> (i32, i32) {
    %c0_i32 = arith.constant 0 : i32
    %c0_i32_0 = arith.constant 0 : i32
    %c0_i32_1 = arith.constant 0 : i32
    return %c0_i32, %c0_i32_0 : i32, i32
  }
  func.func @transform_4(%arg0: i32) -> (i32, i32) {
    %c0_i32 = arith.constant 0 : i32
    %c0_i32_0 = arith.constant 0 : i32
    %c0_i32_1 = arith.constant 0 : i32
    return %c0_i32, %c0_i32_0 : i32, i32
  }
  func.func @transform_5(%arg0: i32) -> (i32, i32) {
    %c0_i32 = arith.constant 0 : i32
    %c0_i32_0 = arith.constant 0 : i32
    %c0_i32_1 = arith.constant 0 : i32
    return %c0_i32, %c0_i32_0 : i32, i32
  }
  func.func @transform_6(%arg0: i32) -> (i32, i32) {
    %c0_i32 = arith.constant 0 : i32
    %c0_i32_0 = arith.constant 0 : i32
    %c0_i32_1 = arith.constant 0 : i32
    return %c0_i32, %c0_i32_0 : i32, i32
  }
  func.func @transform_7(%arg0: i32) -> (i32, i32) {
    %c0_i32 = arith.constant 0 : i32
    %c0_i32_0 = arith.constant 0 : i32
    %c0_i32_1 = arith.constant 0 : i32
    return %c0_i32, %c0_i32_0 : i32, i32
  }
  func.func @transform_8(%arg0: i32) -> (i32, i32) {
    %c0_i32 = arith.constant 0 : i32
    %c0_i32_0 = arith.constant 0 : i32
    %c0_i32_1 = arith.constant 0 : i32
    return %c0_i32, %c0_i32_0 : i32, i32
  }
  func.func @transform_9(%arg0: i32) -> (i32, i32) {
    %c0_i32 = arith.constant 0 : i32
    %c0_i32_0 = arith.constant 0 : i32
    return %arg0, %c0_i32 : i32, i32
  }
}

</mosaic_0001>

<llo_original>
// kernel: tpu_custom_call.1
$region0: #{tpu_custom_call.1}
  #allocation0 [shape = 'u32[]', space=smem, size = 0x4, offset = 0x4, fixed_abs, tag = 'smem constant byte address 0x4 - core index']
  #allocation1 [shape = 'u32[72,128]{1,0:T(1,128)}', space=vmem, size = 0x9000, scoped, tag = 'internal scratch']
  #allocation2 [shape = 'f32[64,32]{1,0:T(8,128)}', space=vmem, size = 0x8000, scoped, tag = 'scratch operand']
  %s0 = inlined_call_operand.vmem [shape: f32[8,8,4], index: 0, kind: input, shape index: {}]
  %s1 = inlined_call_operand.vmem [shape: f32[4,32], index: 1, kind: input, shape index: {}]
  %s2 = inlined_call_operand.vmem [shape: f32[32,32], index: 2, kind: input, shape index: {}]
  %s3 = inlined_call_operand.vmem [shape: f32[1,32], index: 3, kind: input, shape index: {}]
  %s4 = inlined_call_operand.vmem [shape: f32[32,32], index: 4, kind: input, shape index: {}]
  %s5 = inlined_call_operand.vmem [shape: f32[32,32], index: 5, kind: input, shape index: {}]
  %s6 = inlined_call_operand.vmem [shape: f32[1,32], index: 6, kind: input, shape index: {}]
  %s7 = inlined_call_operand.vmem [shape: f32[32,8], index: 7, kind: input, shape index: {}]
  %s8 = inlined_call_operand.vmem [shape: f32[1,8], index: 8, kind: input, shape index: {}]
  %s9 = inlined_call_operand.hbm [shape: f32[8,8], index: 9, kind: output, shape index: {}]
  %s10 = sld [smem:[#allocation0]]
  $region46: #{tpu_custom_call.1} parent=0
    _
  %s12 = ssub.s32 1, %s10
  %s13 = scalar_select 0, %s12, %s10
  $region1: #{tpu_custom_call.1} parent=0
    #allocation3 [shape = 'u8[4096]{0}', space=vmem, size = 0x1000, scoped, tag = 'output window, operand 0, single buffered']
    #allocation4 [shape = 's32[1]{0}', space=sflag, size = 0x4, scoped, tag = 'scoped memory for tpu_custom_call.1']
    %14 = vsyncpa [#allocation4], 0
    // Predicated region
    $region2: #{tpu_custom_call.1} parent=1 // pred_check
      _
    $region3: #{tpu_custom_call.1} parent=1 // pred_check_branch
      %16 = sbr.rel (0) target = $region5
    $region4: #{tpu_custom_call.1} parent=1 // pred_region
      _
    $region5: #{tpu_custom_call.1} parent=1 // pred_fallthru
      _
    // Predicated region
    $region6: #{tpu_custom_call.1} parent=1 // pred_check
      _
    $region7: #{tpu_custom_call.1} parent=1 // pred_check_branch
      %18 = sbr.rel (0) target = $region9
    $region8: #{tpu_custom_call.1} parent=1 // pred_region
      _
    $region9: #{tpu_custom_call.1} parent=1 // pred_fallthru
      _
    // Predicated region
    $region10: #{tpu_custom_call.1} parent=1 // pred_check
      _
    $region11: #{tpu_custom_call.1} parent=1 // pred_check_branch
      %20 = sbr.rel (0) target = $region13
    $region12: #{tpu_custom_call.1} parent=1 // pred_region
      _
    $region13: #{tpu_custom_call.1} parent=1 // pred_fallthru
      _
    // Predicated region
    $region14: #{tpu_custom_call.1} parent=1 // pred_check
      _
    $region15: #{tpu_custom_call.1} parent=1 // pred_check_branch
      %22 = sbr.rel (0) target = $region17
    $region16: #{tpu_custom_call.1} parent=1 // pred_region
      _
    $region17: #{tpu_custom_call.1} parent=1 // pred_fallthru
      _
    // Predicated region
    $region18: #{tpu_custom_call.1} parent=1 // pred_check
      _
    $region19: #{tpu_custom_call.1} parent=1 // pred_check_branch
      %24 = sbr.rel (0) target = $region21
    $region20: #{tpu_custom_call.1} parent=1 // pred_region
      _
    $region21: #{tpu_custom_call.1} parent=1 // pred_fallthru
      _
    // Predicated region
    $region22: #{tpu_custom_call.1} parent=1 // pred_check
      _
    $region23: #{tpu_custom_call.1} parent=1 // pred_check_branch
      %26 = sbr.rel (0) target = $region25
    $region24: #{tpu_custom_call.1} parent=1 // pred_region
      _
    $region25: #{tpu_custom_call.1} parent=1 // pred_fallthru
      _
    // Predicated region
    $region26: #{tpu_custom_call.1} parent=1 // pred_check
      _
    $region27: #{tpu_custom_call.1} parent=1 // pred_check_branch
      %28 = sbr.rel (0) target = $region29
    $region28: #{tpu_custom_call.1} parent=1 // pred_region
      _
    $region29: #{tpu_custom_call.1} parent=1 // pred_fallthru
      _
    // Predicated region
    $region30: #{tpu_custom_call.1} parent=1 // pred_check
      _
    $region31: #{tpu_custom_call.1} parent=1 // pred_check_branch
      %30 = sbr.rel (0) target = $region33
    $region32: #{tpu_custom_call.1} parent=1 // pred_region
      _
    $region33: #{tpu_custom_call.1} parent=1 // pred_fallthru
      _
    // Predicated region
    $region34: #{tpu_custom_call.1} parent=1 // pred_check
      _
    $region35: #{tpu_custom_call.1} parent=1 // pred_check_branch
      %32 = sbr.rel (0) target = $region37
    $region36: #{tpu_custom_call.1} parent=1 // pred_region
      _
    $region37: #{tpu_custom_call.1} parent=1 // pred_fallthru
      _
    %v33 = vld [vmem:[%s1] sm:$0xf]
    %v34 = vld [vmem:[%s2] sm:$0xff]
    %v35 = vld [vmem:[%s2 + $0x8] sm:$0xff]
    %v36 = vld [vmem:[%s2 + $0x10] sm:$0xff]
    %v37 = vld [vmem:[%s2 + $0x18] sm:$0xff]
    %v38 = vld [vmem:[%s3] sm:$0x1]
    %v39 = vld [vmem:[%s0] sm:$0xff]
    %v40 = vld [vmem:[%s0 + $0x8] sm:$0xff]
    %v41 = vld [vmem:[%s0 + $0x10] sm:$0xff]
    %v42 = vld [vmem:[%s0 + $0x18] sm:$0xff]
    %v43 = vld [vmem:[%s0 + $0x20] sm:$0xff]
    %v44 = vld [vmem:[%s0 + $0x28] sm:$0xff]
    %v45 = vld [vmem:[%s0 + $0x30] sm:$0xff]
    %v46 = vld [vmem:[%s0 + $0x38] sm:$0xff]
    %v48 = vperm.slane %v38, 0
    %vm50 = vcmask 31744
    %v52 = vsel %vm50, %v39, 0
    %v55 = vsel %vm50, %v40, 0
    %v58 = vsel %vm50, %v41, 0
    %v61 = vsel %vm50, %v42, 0
    %v64 = vsel %vm50, %v43, 0
    %v67 = vsel %vm50, %v44, 0
    %v70 = vsel %vm50, %v45, 0
    %v73 = vsel %vm50, %v46, 0
    %vm75 = vcmask 1043456
    %v77 = vsel %vm75, %v33, 0
    %79 = vmatpush.msra.mxu0 0.0
    %80 = vmatpush.msra.mxu0 0.0
    %81 = vmatpush.msra.mxu0 0.0
    %82 = vmatpush.msra.mxu0 0.0
    %83 = vmatpush.msra.mxu0 0.0
    %84 = vmatpush.msra.mxu0 0.0
    %85 = vmatpush.msra.mxu0 0.0
    %86 = vmatpush.msra.mxu0 0.0
    %87 = vmatpush.msra.mxu0 0.0
    %88 = vmatpush.msra.mxu0 0.0
    %89 = vmatpush.msra.mxu0 0.0
    %90 = vmatpush.msra.mxu0 0.0
    %91 = vmatpush.msra.mxu0 0.0
    %92 = vmatpush.msra.mxu0 0.0
    %93 = vmatpush.msra.mxu0 0.0
    %94 = vmatpush.msra.mxu0 %v77
    %95 = vmatmul.f32.gmra.mxu0 %v52
    %v96 = vpop.f32.mrf.mxu0
    %v97 = vadd.f32 %v48, %v96
    %98 = vmatmul.f32.gmra.mxu0 %v55
    %v99 = vpop.f32.mrf.mxu0
    %v100 = vadd.f32 %v48, %v99
    %101 = vmatmul.f32.gmra.mxu0 %v58
    %v102 = vpop.f32.mrf.mxu0
    %v103 = vadd.f32 %v48, %v102
    %104 = vmatmul.f32.gmra.mxu0 %v61
    %v105 = vpop.f32.mrf.mxu0
    %v106 = vadd.f32 %v48, %v105
    %107 = vmatmul.f32.gmra.mxu0 %v64
    %v108 = vpop.f32.mrf.mxu0
    %v109 = vadd.f32 %v48, %v108
    %110 = vmatmul.f32.gmra.mxu0 %v67
    %v111 = vpop.f32.mrf.mxu0
    %v112 = vadd.f32 %v48, %v111
    %113 = vmatmul.f32.gmra.mxu0 %v70
    %v114 = vpop.f32.mrf.mxu0
    %v115 = vadd.f32 %v48, %v114
    %116 = vmatmul.f32.gmra.mxu0 %v73
    %v117 = vpop.f32.mrf.mxu0
    %v118 = vadd.f32 %v48, %v117
    %119 = vdwg.mxu0
    %vm120 = vcmask 261120
    %121 = vst.msk [vmem:[#allocation2] sm:$0xff] %vm120, %v97
    %122 = vst.msk [vmem:[#allocation2 + $0x8] sm:$0xff] %vm120, %v100
    %123 = vst.msk [vmem:[#allocation2 + $0x10] sm:$0xff] %vm120, %v103
    %124 = vst.msk [vmem:[#allocation2 + $0x18] sm:$0xff] %vm120, %v106
    %125 = vst.msk [vmem:[#allocation2 + $0x20] sm:$0xff] %vm120, %v109
    %126 = vst.msk [vmem:[#allocation2 + $0x28] sm:$0xff] %vm120, %v112
    %127 = vst.msk [vmem:[#allocation2 + $0x30] sm:$0xff] %vm120, %v115
    %128 = vst.msk [vmem:[#allocation2 + $0x38] sm:$0xff] %vm120, %v118
    %v129 = vld [vmem:[#allocation2] sm:$0xff]
    %v131 = vsel %vm120, 0.0, 0
    %133 = vmatpush.msra.mxu0 0.0
    %134 = vmatpush.msra.mxu0 0.0
    %135 = vmatpush.msra.mxu0 0.0
    %136 = vmatpush.msra.mxu0 0.0
    %137 = vmatpush.msra.mxu0 0.0
    %138 = vmatpush.msra.mxu0 0.0
    %139 = vmatpush.msra.mxu0 0.0
    %140 = vmatpush.msra.mxu0 0.0
    %141 = vmatpush.msra.mxu0 0.0
    %142 = vmatpush.msra.mxu0 0.0
    %143 = vmatpush.msra.mxu0 0.0
    %144 = vmatpush.msra.mxu0 0.0
    %145 = vmatpush.msra.mxu0 %v37
    %146 = vmatpush.msra.mxu0 %v36
    %147 = vmatpush.msra.mxu0 %v35
    %148 = vmatpush.msra.mxu0 %v34
    %149 = vmatmul.f32.gmra.mxu0 %v131
    %v150 = vpop.f32.mrf.mxu0
    %v151 = vadd.f32 0.0, %v150
    %152 = vdwg.mxu0
    %v153 = vadd.f32 %v129, %v151
    %v154 = vtanh.pop %v153
    %155 = vst.msk [vmem:[#allocation2] sm:$0xff] %vm120, %v154
    %s156 = scalar_lea.vmem [#allocation2], 8
    %v157 = vld [vmem:[%s156] sm:$0xff]
    %v159 = vsel %vm120, %v154, 0
    %161 = vmatpush.msra.mxu0 0.0
    %162 = vmatpush.msra.mxu0 0.0
    %163 = vmatpush.msra.mxu0 0.0
    %164 = vmatpush.msra.mxu0 0.0
    %165 = vmatpush.msra.mxu0 0.0
    %166 = vmatpush.msra.mxu0 0.0
    %167 = vmatpush.msra.mxu0 0.0
    %168 = vmatpush.msra.mxu0 0.0
    %169 = vmatpush.msra.mxu0 0.0
    %170 = vmatpush.msra.mxu0 0.0
    %171 = vmatpush.msra.mxu0 0.0
    %172 = vmatpush.msra.mxu0 0.0
    %173 = vmatpush.msra.mxu0 %v37
    %174 = vmatpush.msra.mxu0 %v36
    %175 = vmatpush.msra.mxu0 %v35
    %176 = vmatpush.msra.mxu0 %v34
    %177 = vmatmul.f32.gmra.mxu0 %v159
    %v178 = vpop.f32.mrf.mxu0
    %v179 = vadd.f32 0.0, %v178
    %180 = vdwg.mxu0
    %v181 = vadd.f32 %v157, %v179
    %v182 = vtanh.pop %v181
    %183 = vst.msk [vmem:[%s156] sm:$0xff] %vm120, %v182
    %s184 = scalar_lea.vmem [#allocation2], 16
    %v185 = vld [vmem:[%s184] sm:$0xff]
    %v187 = vsel %vm120, %v182, 0
    %189 = vmatpush.msra.mxu0 0.0
    %190 = vmatpush.msra.mxu0 0.0
    %191 = vmatpush.msra.mxu0 0.0
    %192 = vmatpush.msra.mxu0 0.0
    %193 = vmatpush.msra.mxu0 0.0
    %194 = vmatpush.msra.mxu0 0.0
    %195 = vmatpush.msra.mxu0 0.0
    %196 = vmatpush.msra.mxu0 0.0
    %197 = vmatpush.msra.mxu0 0.0
    %198 = vmatpush.msra.mxu0 0.0
    %199 = vmatpush.msra.mxu0 0.0
    %200 = vmatpush.msra.mxu0 0.0
    %201 = vmatpush.msra.mxu0 %v37
    %202 = vmatpush.msra.mxu0 %v36
    %203 = vmatpush.msra.mxu0 %v35
    %204 = vmatpush.msra.mxu0 %v34
    %205 = vmatmul.f32.gmra.mxu0 %v187
    %v206 = vpop.f32.mrf.mxu0
    %v207 = vadd.f32 0.0, %v206
    %208 = vdwg.mxu0
    %v209 = vadd.f32 %v185, %v207
    %v210 = vtanh.pop %v209
    %211 = vst.msk [vmem:[%s184] sm:$0xff] %vm120, %v210
    %s212 = scalar_lea.vmem [#allocation2], 24
    %v213 = vld [vmem:[%s212] sm:$0xff]
    %v215 = vsel %vm120, %v210, 0
    %217 = vmatpush.msra.mxu0 0.0
    %218 = vmatpush.msra.mxu0 0.0
    %219 = vmatpush.msra.mxu0 0.0
    %220 = vmatpush.msra.mxu0 0.0
    %221 = vmatpush.msra.mxu0 0.0
    %222 = vmatpush.msra.mxu0 0.0
    %223 = vmatpush.msra.mxu0 0.0
    %224 = vmatpush.msra.mxu0 0.0
    %225 = vmatpush.msra.mxu0 0.0
    %226 = vmatpush.msra.mxu0 0.0
    %227 = vmatpush.msra.mxu0 0.0
    %228 = vmatpush.msra.mxu0 0.0
    %229 = vmatpush.msra.mxu0 %v37
    %230 = vmatpush.msra.mxu0 %v36
    %231 = vmatpush.msra.mxu0 %v35
    %232 = vmatpush.msra.mxu0 %v34
    %233 = vmatmul.f32.gmra.mxu0 %v215
    %v234 = vpop.f32.mrf.mxu0
    %v235 = vadd.f32 0.0, %v234
    %236 = vdwg.mxu0
    %v237 = vadd.f32 %v213, %v235
    %v238 = vtanh.pop %v237
    %239 = vst.msk [vmem:[%s212] sm:$0xff] %vm120, %v238
    %s240 = scalar_lea.vmem [#allocation2], 32
    %v241 = vld [vmem:[%s240] sm:$0xff]
    %v243 = vsel %vm120, %v238, 0
    %245 = vmatpush.msra.mxu0 0.0
    %246 = vmatpush.msra.mxu0 0.0
    %247 = vmatpush.msra.mxu0 0.0
    %248 = vmatpush.msra.mxu0 0.0
    %249 = vmatpush.msra.mxu0 0.0
    %250 = vmatpush.msra.mxu0 0.0
    %251 = vmatpush.msra.mxu0 0.0
    %252 = vmatpush.msra.mxu0 0.0
    %253 = vmatpush.msra.mxu0 0.0
    %254 = vmatpush.msra.mxu0 0.0
    %255 = vmatpush.msra.mxu0 0.0
    %256 = vmatpush.msra.mxu0 0.0
    %257 = vmatpush.msra.mxu0 %v37
    %258 = vmatpush.msra.mxu0 %v36
    %259 = vmatpush.msra.mxu0 %v35
    %260 = vmatpush.msra.mxu0 %v34
    %261 = vmatmul.f32.gmra.mxu0 %v243
    %v262 = vpop.f32.mrf.mxu0
    %v263 = vadd.f32 0.0, %v262
    %264 = vdwg.mxu0
    %v265 = vadd.f32 %v241, %v263
    %v266 = vtanh.pop %v265
    %267 = vst.msk [vmem:[%s240] sm:$0xff] %vm120, %v266
    %s268 = scalar_lea.vmem [#allocation2], 40
    %v269 = vld [vmem:[%s268] sm:$0xff]
    %v271 = vsel %vm120, %v266, 0
    %273 = vmatpush.msra.mxu0 0.0
    %274 = vmatpush.msra.mxu0 0.0
    %275 = vmatpush.msra.mxu0 0.0
    %276 = vmatpush.msra.mxu0 0.0
    %277 = vmatpush.msra.mxu0 0.0
    %278 = vmatpush.msra.mxu0 0.0
    %279 = vmatpush.msra.mxu0 0.0
    %280 = vmatpush.msra.mxu0 0.0
    %281 = vmatpush.msra.mxu0 0.0
    %282 = vmatpush.msra.mxu0 0.0
    %283 = vmatpush.msra.mxu0 0.0
    %284 = vmatpush.msra.mxu0 0.0
    %285 = vmatpush.msra.mxu0 %v37
    %286 = vmatpush.msra.mxu0 %v36
    %287 = vmatpush.msra.mxu0 %v35
    %288 = vmatpush.msra.mxu0 %v34
    %289 = vmatmul.f32.gmra.mxu0 %v271
    %v290 = vpop.f32.mrf.mxu0
    %v291 = vadd.f32 0.0, %v290
    %292 = vdwg.mxu0
    %v293 = vadd.f32 %v269, %v291
    %v294 = vtanh.pop %v293
    %295 = vst.msk [vmem:[%s268] sm:$0xff] %vm120, %v294
    %s296 = scalar_lea.vmem [#allocation2], 48
    %v297 = vld [vmem:[%s296] sm:$0xff]
    %v299 = vsel %vm120, %v294, 0
    %301 = vmatpush.msra.mxu0 0.0
    %302 = vmatpush.msra.mxu0 0.0
    %303 = vmatpush.msra.mxu0 0.0
    %304 = vmatpush.msra.mxu0 0.0
    %305 = vmatpush.msra.mxu0 0.0
    %306 = vmatpush.msra.mxu0 0.0
    %307 = vmatpush.msra.mxu0 0.0
    %308 = vmatpush.msra.mxu0 0.0
    %309 = vmatpush.msra.mxu0 0.0
    %310 = vmatpush.msra.mxu0 0.0
    %311 = vmatpush.msra.mxu0 0.0
    %312 = vmatpush.msra.mxu0 0.0
    %313 = vmatpush.msra.mxu0 %v37
    %314 = vmatpush.msra.mxu0 %v36
    %315 = vmatpush.msra.mxu0 %v35
    %316 = vmatpush.msra.mxu0 %v34
    %317 = vmatmul.f32.gmra.mxu0 %v299
    %v318 = vpop.f32.mrf.mxu0
    %v319 = vadd.f32 0.0, %v318
    %320 = vdwg.mxu0
    %v321 = vadd.f32 %v297, %v319
    %v322 = vtanh.pop %v321
    %323 = vst.msk [vmem:[%s296] sm:$0xff] %vm120, %v322
    %s324 = scalar_lea.vmem [#allocation2], 56
    %v325 = vld [vmem:[%s324] sm:$0xff]
    %v327 = vsel %vm120, %v322, 0
    %329 = vmatpush.msra.mxu0 0.0
    %330 = vmatpush.msra.mxu0 0.0
    %331 = vmatpush.msra.mxu0 0.0
    %332 = vmatpush.msra.mxu0 0.0
    %333 = vmatpush.msra.mxu0 0.0
    %334 = vmatpush.msra.mxu0 0.0
    %335 = vmatpush.msra.mxu0 0.0
    %336 = vmatpush.msra.mxu0 0.0
    %337 = vmatpush.msra.mxu0 0.0
    %338 = vmatpush.msra.mxu0 0.0
    %339 = vmatpush.msra.mxu0 0.0
    %340 = vmatpush.msra.mxu0 0.0
    %341 = vmatpush.msra.mxu0 %v37
    %342 = vmatpush.msra.mxu0 %v36
    %343 = vmatpush.msra.mxu0 %v35
    %344 = vmatpush.msra.mxu0 %v34
    %345 = vmatmul.f32.gmra.mxu0 %v327
    %v346 = vpop.f32.mrf.mxu0
    %v347 = vadd.f32 0.0, %v346
    %348 = vdwg.mxu0
    %v349 = vadd.f32 %v325, %v347
    %v350 = vtanh.pop %v349
    %351 = vst.msk [vmem:[%s324] sm:$0xff] %vm120, %v350
    %v352 = vld [vmem:[%s4] sm:$0xff]
    %v353 = vld [vmem:[%s4 + $0x8] sm:$0xff]
    %v354 = vld [vmem:[%s4 + $0x10] sm:$0xff]
    %v355 = vld [vmem:[%s4 + $0x18] sm:$0xff]
    %v356 = vld [vmem:[%s5] sm:$0xff]
    %v357 = vld [vmem:[%s5 + $0x8] sm:$0xff]
    %v358 = vld [vmem:[%s5 + $0x10] sm:$0xff]
    %v359 = vld [vmem:[%s5 + $0x18] sm:$0xff]
    %v360 = vld [vmem:[%s6] sm:$0x1]
    %v361 = vld [vmem:[#allocation2] sm:$0xff]
    %v362 = vld [vmem:[#allocation2 + $0x8] sm:$0xff]
    %v363 = vld [vmem:[#allocation2 + $0x10] sm:$0xff]
    %v364 = vld [vmem:[#allocation2 + $0x18] sm:$0xff]
    %v365 = vld [vmem:[#allocation2 + $0x20] sm:$0xff]
    %v366 = vld [vmem:[#allocation2 + $0x28] sm:$0xff]
    %v367 = vld [vmem:[#allocation2 + $0x30] sm:$0xff]
    %v368 = vld [vmem:[#allocation2 + $0x38] sm:$0xff]
    %v370 = vperm.slane %v360, 0
    %v373 = vsel %vm120, %v361, 0
    %v376 = vsel %vm120, %v362, 0
    %v379 = vsel %vm120, %v363, 0
    %v382 = vsel %vm120, %v364, 0
    %v385 = vsel %vm120, %v365, 0
    %v388 = vsel %vm120, %v366, 0
    %v391 = vsel %vm120, %v367, 0
    %v394 = vsel %vm120, %v368, 0
    %396 = vmatpush.msra.mxu0 0.0
    %397 = vmatpush.msra.mxu0 0.0
    %398 = vmatpush.msra.mxu0 0.0
    %399 = vmatpush.msra.mxu0 0.0
    %400 = vmatpush.msra.mxu0 0.0
    %401 = vmatpush.msra.mxu0 0.0
    %402 = vmatpush.msra.mxu0 0.0
    %403 = vmatpush.msra.mxu0 0.0
    %404 = vmatpush.msra.mxu0 0.0
    %405 = vmatpush.msra.mxu0 0.0
    %406 = vmatpush.msra.mxu0 0.0
    %407 = vmatpush.msra.mxu0 0.0
    %408 = vmatpush.msra.mxu0 %v355
    %409 = vmatpush.msra.mxu0 %v354
    %410 = vmatpush.msra.mxu0 %v353
    %411 = vmatpush.msra.mxu0 %v352
    %412 = vmatmul.f32.gmra.mxu0 %v373
    %v413 = vpop.f32.mrf.mxu0
    %v414 = vadd.f32 %v370, %v413
    %415 = vmatmul.f32.gmra.mxu0 %v376
    %v416 = vpop.f32.mrf.mxu0
    %v417 = vadd.f32 %v370, %v416
    %418 = vmatmul.f32.gmra.mxu0 %v379
    %v419 = vpop.f32.mrf.mxu0
    %v420 = vadd.f32 %v370, %v419
    %421 = vmatmul.f32.gmra.mxu0 %v382
    %v422 = vpop.f32.mrf.mxu0
    %v423 = vadd.f32 %v370, %v422
    %424 = vmatmul.f32.gmra.mxu0 %v385
    %v425 = vpop.f32.mrf.mxu0
    %v426 = vadd.f32 %v370, %v425
    %427 = vmatmul.f32.gmra.mxu0 %v388
    %v428 = vpop.f32.mrf.mxu0
    %v429 = vadd.f32 %v370, %v428
    %430 = vmatmul.f32.gmra.mxu0 %v391
    %v431 = vpop.f32.mrf.mxu0
    %v432 = vadd.f32 %v370, %v431
    %433 = vmatmul.f32.gmra.mxu0 %v394
    %v434 = vpop.f32.mrf.mxu0
    %v435 = vadd.f32 %v370, %v434
    %436 = vdwg.mxu0
    %437 = vst.msk [vmem:[#allocation2] sm:$0xff] %vm120, %v414
    %438 = vst.msk [vmem:[#allocation2 + $0x8] sm:$0xff] %vm120, %v417
    %439 = vst.msk [vmem:[#allocation2 + $0x10] sm:$0xff] %vm120, %v420
    %440 = vst.msk [vmem:[#allocation2 + $0x18] sm:$0xff] %vm120, %v423
    %441 = vst.msk [vmem:[#allocation2 + $0x20] sm:$0xff] %vm120, %v426
    %442 = vst.msk [vmem:[#allocation2 + $0x28] sm:$0xff] %vm120, %v429
    %443 = vst.msk [vmem:[#allocation2 + $0x30] sm:$0xff] %vm120, %v432
    %444 = vst.msk [vmem:[#allocation2 + $0x38] sm:$0xff] %vm120, %v435
    %v445 = vld [vmem:[#allocation2] sm:$0xff]
    %446 = vmatpush.msra.mxu0 0.0
    %447 = vmatpush.msra.mxu0 0.0
    %448 = vmatpush.msra.mxu0 0.0
    %449 = vmatpush.msra.mxu0 0.0
    %450 = vmatpush.msra.mxu0 0.0
    %451 = vmatpush.msra.mxu0 0.0
    %452 = vmatpush.msra.mxu0 0.0
    %453 = vmatpush.msra.mxu0 0.0
    %454 = vmatpush.msra.mxu0 0.0
    %455 = vmatpush.msra.mxu0 0.0
    %456 = vmatpush.msra.mxu0 0.0
    %457 = vmatpush.msra.mxu0 0.0
    %458 = vmatpush.msra.mxu0 %v359
    %459 = vmatpush.msra.mxu0 %v358
    %460 = vmatpush.msra.mxu0 %v357
    %461 = vmatpush.msra.mxu0 %v356
    %462 = vmatmul.f32.gmra.mxu0 %v131
    %v463 = vpop.f32.mrf.mxu0
    %v464 = vadd.f32 0.0, %v463
    %465 = vdwg.mxu0
    %v466 = vadd.f32 %v445, %v464
    %v467 = vtanh.pop %v466
    %468 = vst.msk [vmem:[#allocation2] sm:$0xff] %vm120, %v467
    %v469 = vld [vmem:[%s156] sm:$0xff]
    %v471 = vsel %vm120, %v467, 0
    %473 = vmatpush.msra.mxu0 0.0
    %474 = vmatpush.msra.mxu0 0.0
    %475 = vmatpush.msra.mxu0 0.0
    %476 = vmatpush.msra.mxu0 0.0
    %477 = vmatpush.msra.mxu0 0.0
    %478 = vmatpush.msra.mxu0 0.0
    %479 = vmatpush.msra.mxu0 0.0
    %480 = vmatpush.msra.mxu0 0.0
    %481 = vmatpush.msra.mxu0 0.0
    %482 = vmatpush.msra.mxu0 0.0
    %483 = vmatpush.msra.mxu0 0.0
    %484 = vmatpush.msra.mxu0 0.0
    %485 = vmatpush.msra.mxu0 %v359
    %486 = vmatpush.msra.mxu0 %v358
    %487 = vmatpush.msra.mxu0 %v357
    %488 = vmatpush.msra.mxu0 %v356
    %489 = vmatmul.f32.gmra.mxu0 %v471
    %v490 = vpop.f32.mrf.mxu0
    %v491 = vadd.f32 0.0, %v490
    %492 = vdwg.mxu0
    %v493 = vadd.f32 %v469, %v491
    %v494 = vtanh.pop %v493
    %495 = vst.msk [vmem:[%s156] sm:$0xff] %vm120, %v494
    %v496 = vld [vmem:[%s184] sm:$0xff]
    %v498 = vsel %vm120, %v494, 0
    %500 = vmatpush.msra.mxu0 0.0
    %501 = vmatpush.msra.mxu0 0.0
    %502 = vmatpush.msra.mxu0 0.0
    %503 = vmatpush.msra.mxu0 0.0
    %504 = vmatpush.msra.mxu0 0.0
    %505 = vmatpush.msra.mxu0 0.0
    %506 = vmatpush.msra.mxu0 0.0
    %507 = vmatpush.msra.mxu0 0.0
    %508 = vmatpush.msra.mxu0 0.0
    %509 = vmatpush.msra.mxu0 0.0
    %510 = vmatpush.msra.mxu0 0.0
    %511 = vmatpush.msra.mxu0 0.0
    %512 = vmatpush.msra.mxu0 %v359
    %513 = vmatpush.msra.mxu0 %v358
    %514 = vmatpush.msra.mxu0 %v357
    %515 = vmatpush.msra.mxu0 %v356
    %516 = vmatmul.f32.gmra.mxu0 %v498
    %v517 = vpop.f32.mrf.mxu0
    %v518 = vadd.f32 0.0, %v517
    %519 = vdwg.mxu0
    %v520 = vadd.f32 %v496, %v518
    %v521 = vtanh.pop %v520
    %522 = vst.msk [vmem:[%s184] sm:$0xff] %vm120, %v521
    %v523 = vld [vmem:[%s212] sm:$0xff]
    %v525 = vsel %vm120, %v521, 0
    %527 = vmatpush.msra.mxu0 0.0
    %528 = vmatpush.msra.mxu0 0.0
    %529 = vmatpush.msra.mxu0 0.0
    %530 = vmatpush.msra.mxu0 0.0
    %531 = vmatpush.msra.mxu0 0.0
    %532 = vmatpush.msra.mxu0 0.0
    %533 = vmatpush.msra.mxu0 0.0
    %534 = vmatpush.msra.mxu0 0.0
    %535 = vmatpush.msra.mxu0 0.0
    %536 = vmatpush.msra.mxu0 0.0
    %537 = vmatpush.msra.mxu0 0.0
    %538 = vmatpush.msra.mxu0 0.0
    %539 = vmatpush.msra.mxu0 %v359
    %540 = vmatpush.msra.mxu0 %v358
    %541 = vmatpush.msra.mxu0 %v357
    %542 = vmatpush.msra.mxu0 %v356
    %543 = vmatmul.f32.gmra.mxu0 %v525
    %v544 = vpop.f32.mrf.mxu0
    %v545 = vadd.f32 0.0, %v544
    %546 = vdwg.mxu0
    %v547 = vadd.f32 %v523, %v545
    %v548 = vtanh.pop %v547
    %549 = vst.msk [vmem:[%s212] sm:$0xff] %vm120, %v548
    %v550 = vld [vmem:[%s240] sm:$0xff]
    %v552 = vsel %vm120, %v548, 0
    %554 = vmatpush.msra.mxu0 0.0
    %555 = vmatpush.msra.mxu0 0.0
    %556 = vmatpush.msra.mxu0 0.0
    %557 = vmatpush.msra.mxu0 0.0
    %558 = vmatpush.msra.mxu0 0.0
    %559 = vmatpush.msra.mxu0 0.0
    %560 = vmatpush.msra.mxu0 0.0
    %561 = vmatpush.msra.mxu0 0.0
    %562 = vmatpush.msra.mxu0 0.0
    %563 = vmatpush.msra.mxu0 0.0
    %564 = vmatpush.msra.mxu0 0.0
    %565 = vmatpush.msra.mxu0 0.0
    %566 = vmatpush.msra.mxu0 %v359
    %567 = vmatpush.msra.mxu0 %v358
    %568 = vmatpush.msra.mxu0 %v357
    %569 = vmatpush.msra.mxu0 %v356
    %570 = vmatmul.f32.gmra.mxu0 %v552
    %v571 = vpop.f32.mrf.mxu0
    %v572 = vadd.f32 0.0, %v571
    %573 = vdwg.mxu0
    %v574 = vadd.f32 %v550, %v572
    %v575 = vtanh.pop %v574
    %576 = vst.msk [vmem:[%s240] sm:$0xff] %vm120, %v575
    %v577 = vld [vmem:[%s268] sm:$0xff]
    %v579 = vsel %vm120, %v575, 0
    %581 = vmatpush.msra.mxu0 0.0
    %582 = vmatpush.msra.mxu0 0.0
    %583 = vmatpush.msra.mxu0 0.0
    %584 = vmatpush.msra.mxu0 0.0
    %585 = vmatpush.msra.mxu0 0.0
    %586 = vmatpush.msra.mxu0 0.0
    %587 = vmatpush.msra.mxu0 0.0
    %588 = vmatpush.msra.mxu0 0.0
    %589 = vmatpush.msra.mxu0 0.0
    %590 = vmatpush.msra.mxu0 0.0
    %591 = vmatpush.msra.mxu0 0.0
    %592 = vmatpush.msra.mxu0 0.0
    %593 = vmatpush.msra.mxu0 %v359
    %594 = vmatpush.msra.mxu0 %v358
    %595 = vmatpush.msra.mxu0 %v357
    %596 = vmatpush.msra.mxu0 %v356
    %597 = vmatmul.f32.gmra.mxu0 %v579
    %v598 = vpop.f32.mrf.mxu0
    %v599 = vadd.f32 0.0, %v598
    %600 = vdwg.mxu0
    %v601 = vadd.f32 %v577, %v599
    %v602 = vtanh.pop %v601
    %603 = vst.msk [vmem:[%s268] sm:$0xff] %vm120, %v602
    %v604 = vld [vmem:[%s296] sm:$0xff]
    %v606 = vsel %vm120, %v602, 0
    %608 = vmatpush.msra.mxu0 0.0
    %609 = vmatpush.msra.mxu0 0.0
    %610 = vmatpush.msra.mxu0 0.0
    %611 = vmatpush.msra.mxu0 0.0
    %612 = vmatpush.msra.mxu0 0.0
    %613 = vmatpush.msra.mxu0 0.0
    %614 = vmatpush.msra.mxu0 0.0
    %615 = vmatpush.msra.mxu0 0.0
    %616 = vmatpush.msra.mxu0 0.0
    %617 = vmatpush.msra.mxu0 0.0
    %618 = vmatpush.msra.mxu0 0.0
    %619 = vmatpush.msra.mxu0 0.0
    %620 = vmatpush.msra.mxu0 %v359
    %621 = vmatpush.msra.mxu0 %v358
    %622 = vmatpush.msra.mxu0 %v357
    %623 = vmatpush.msra.mxu0 %v356
    %624 = vmatmul.f32.gmra.mxu0 %v606
    %v625 = vpop.f32.mrf.mxu0
    %v626 = vadd.f32 0.0, %v625
    %627 = vdwg.mxu0
    %v628 = vadd.f32 %v604, %v626
    %v629 = vtanh.pop %v628
    %630 = vst.msk [vmem:[%s296] sm:$0xff] %vm120, %v629
    %v631 = vld [vmem:[%s324] sm:$0xff]
    %v633 = vsel %vm120, %v629, 0
    %635 = vmatpush.msra.mxu0 0.0
    %636 = vmatpush.msra.mxu0 0.0
    %637 = vmatpush.msra.mxu0 0.0
    %638 = vmatpush.msra.mxu0 0.0
    %639 = vmatpush.msra.mxu0 0.0
    %640 = vmatpush.msra.mxu0 0.0
    %641 = vmatpush.msra.mxu0 0.0
    %642 = vmatpush.msra.mxu0 0.0
    %643 = vmatpush.msra.mxu0 0.0
    %644 = vmatpush.msra.mxu0 0.0
    %645 = vmatpush.msra.mxu0 0.0
    %646 = vmatpush.msra.mxu0 0.0
    %647 = vmatpush.msra.mxu0 %v359
    %648 = vmatpush.msra.mxu0 %v358
    %649 = vmatpush.msra.mxu0 %v357
    %650 = vmatpush.msra.mxu0 %v356
    %651 = vmatmul.f32.gmra.mxu0 %v633
    %v652 = vpop.f32.mrf.mxu0
    %v653 = vadd.f32 0.0, %v652
    %654 = vdwg.mxu0
    %v655 = vadd.f32 %v631, %v653
    %v656 = vtanh.pop %v655
    %657 = vst.msk [vmem:[%s324] sm:$0xff] %vm120, %v656
    %v658 = vld [vmem:[%s7] sm:$0xff]
    %v659 = vld [vmem:[%s7 + $0x8] sm:$0xff]
    %v660 = vld [vmem:[%s7 + $0x10] sm:$0xff]
    %v661 = vld [vmem:[%s7 + $0x18] sm:$0xff]
    %v662 = vld [vmem:[%s8] sm:$0x1]
    %v664 = vperm.slane %v662, 0
    %v667 = vsel %vm120, %v656, 0
    %669 = vmatpush.msra.mxu0 0.0
    %670 = vmatpush.msra.mxu0 0.0
    %671 = vmatpush.msra.mxu0 0.0
    %672 = vmatpush.msra.mxu0 0.0
    %673 = vmatpush.msra.mxu0 0.0
    %674 = vmatpush.msra.mxu0 0.0
    %675 = vmatpush.msra.mxu0 0.0
    %676 = vmatpush.msra.mxu0 0.0
    %677 = vmatpush.msra.mxu0 0.0
    %678 = vmatpush.msra.mxu0 0.0
    %679 = vmatpush.msra.mxu0 0.0
    %680 = vmatpush.msra.mxu0 0.0
    %681 = vmatpush.msra.mxu0 %v661
    %682 = vmatpush.msra.mxu0 %v660
    %683 = vmatpush.msra.mxu0 %v659
    %684 = vmatpush.msra.mxu0 %v658
    %685 = vmatmul.f32.gmra.mxu0 %v667
    %v686 = vpop.f32.mrf.mxu0
    %v687 = vadd.f32 %v664, %v686
    %688 = vdwg.mxu0
    %vm689 = vcmask 64512
    %690 = vst.msk [vmem:[#allocation3] sm:$0xff] %vm689, %v687
    // Predicated region
    $region38: #{tpu_custom_call.1} parent=1 // pred_check
      _
    $region39: #{tpu_custom_call.1} parent=1 // pred_check_branch
      %692 = sbr.rel (0) target = $region41
    $region40: #{tpu_custom_call.1} parent=1 // pred_region
      %694 = vsyncadd [#allocation4], 0
      %s696 = sshll.u32 [#allocation3], 4
      %s697 = int_to_ptr.vmem [resolvable:$true] %s696
      %s698 = sshll.u32 %s9, 4
      %s699 = int_to_ptr.hbm [resolvable:$true] %s698
      %701 = dma.vmem_to_hbm [thread:$0]  %s697, 128, %s699, [#allocation4]
    $region41: #{tpu_custom_call.1} parent=1 // pred_fallthru
      _
    // Predicated region
    $region42: #{tpu_custom_call.1} parent=1 // pred_check
      _
    $region43: #{tpu_custom_call.1} parent=1 // pred_check_branch
      %703 = sbr.rel (0) target = $region45
    $region44: #{tpu_custom_call.1} parent=1 // pred_region
      %705 = dma.done [#allocation4], 128
    $region45: #{tpu_custom_call.1} parent=1 // pred_fallthru
      _
    %706 = vsyncpa [#allocation4], 1

</llo_original>
